<compile_context>
chip_gen: v7x
topology: tpu7x:2x2x1
jax: 0.10.0
libtpu: 0.0.40
codegen_flags: <defaults>
</compile_context>

<pallas_src>
import functools

import jax
import jax.numpy as jnp
from jax.experimental import pallas as pl
from jax.experimental.pallas import tpu as pltpu

INPUT_SIZE = 10


def _round_up(a: int, m: int) -> int:
    return ((a + m - 1) // m) * m


def linear_kernel(w_ref, b_ref, x_ref, o_ref):
    # w_ref : SMEM (D,)   f32   -- 10 weights, read as scalars
    # b_ref : SMEM (1,)   f32   -- bias scalar
    # x_ref : VMEM (D, TB) f32  -- feature-major batch tile (lane-dense)
    # o_ref : VMEM (1, TB) f32  -- lane-dense output tile
    d_dim = x_ref.shape[0]
    # Unrolled scalar-broadcast multiply-accumulate over the (static) D=10
    # features: each row load is a lane-dense (1, TB) vld, each op is pure VPU.
    acc = x_ref[pl.ds(0, 1), :] * w_ref[0]
    for d in range(1, d_dim):
        acc = acc + x_ref[pl.ds(d, 1), :] * w_ref[d]
    o_ref[...] = (acc + b_ref[0]).astype(o_ref.dtype)


@functools.partial(jax.jit, static_argnames=("tile_b",))
def simple_binary_classifier(x, weight, bias, *, tile_b=2048):
    """Forward of nn.Linear(D, 1): x:(B,D), weight:(1,D), bias:(1,) -> (B,1)."""
    B, D = x.shape
    assert weight.shape == (1, D)
    assert bias.shape == (1,)

    # Feature-major, lane-dense layout: (D, B) with the batch on the lane axis.
    x_t = x.astype(jnp.float32).T                       # (D, B)

    # Pick a lane-dense batch tile (multiple of 128) and pad the batch to it.
    b128 = _round_up(B, 128)
    tb = min(tile_b, b128)
    b_pad = _round_up(B, tb)
    if b_pad != B:
        x_t = jnp.pad(x_t, ((0, 0), (0, b_pad - B)))

    w_s = weight.reshape(D).astype(jnp.float32)         # SMEM scalars
    b_s = bias.astype(jnp.float32)                      # SMEM scalar

    cost = pl.CostEstimate(
        flops=2 * b_pad * D,
        transcendentals=0,
        bytes_accessed=4 * (b_pad * D + D + 1 + b_pad),
    )

    out = pl.pallas_call(
        linear_kernel,
        out_shape=jax.ShapeDtypeStruct((1, b_pad), jnp.float32),
        grid=(b_pad // tb,),
        in_specs=[
            pl.BlockSpec(memory_space=pltpu.MemorySpace.SMEM),   # weights (D,)
            pl.BlockSpec(memory_space=pltpu.MemorySpace.SMEM),   # bias (1,)
            pl.BlockSpec((D, tb), lambda i: (0, i)),             # x_t tile (D, TB)
        ],
        out_specs=pl.BlockSpec((1, tb), lambda i: (0, i)),       # lane-dense out
        compiler_params=pltpu.CompilerParams(
            dimension_semantics=("parallel",),
        ),
        cost_estimate=cost,
    )(w_s, b_s, x_t)

    # Back to the module's (B, 1) contract.
    return out[0, :B].reshape(B, 1)


if __name__ == "__main__":
    key = jax.random.PRNGKey(0)
    kx, kw, kb, kx2 = jax.random.split(key, 4)

    # Deterministic parameter init (mimics nn.Linear's uniform(-1/sqrt(in), 1/sqrt(in)))
    bound = 1.0 / jnp.sqrt(jnp.float32(INPUT_SIZE))
    weight = jax.random.uniform(kw, (1, INPUT_SIZE), minval=-bound, maxval=bound,
                                dtype=jnp.float32)
    bias = jax.random.uniform(kb, (1,), minval=-bound, maxval=bound,
                              dtype=jnp.float32)

    # Small batch consistent with the module's intended use.
    batch = 8
    x = jax.random.normal(kx, (batch, INPUT_SIZE), dtype=jnp.float32)
    out = simple_binary_classifier(x, weight, bias)
    out = jax.block_until_ready(out)
    ref = x @ weight.T + bias[None, :]
    assert out.shape == (batch, 1)
    assert jnp.allclose(out, ref, atol=1e-5, rtol=1e-5)

    # Exercise the multi-tile (grid > 1) + padding path with a non-multiple batch.
    batch2 = 300
    x2 = jax.random.normal(kx2, (batch2, INPUT_SIZE), dtype=jnp.float32)
    out2 = simple_binary_classifier(x2, weight, bias, tile_b=128)  # grid=(3,)
    out2 = jax.block_until_ready(out2)
    ref2 = x2 @ weight.T + bias[None, :]
    assert out2.shape == (batch2, 1)
    assert jnp.allclose(out2, ref2, atol=1e-5, rtol=1e-5)

    print("KERNEL_OK")
</pallas_src>

<mosaic_0001>
module attributes {stable_mosaic.version = 11 : i64} {
  func.func @linear_kernel(%arg0: i32, %arg1: memref<10xf32, #tpu.memory_space<smem>>, %arg2: memref<1xf32, #tpu.memory_space<smem>>, %arg3: memref<10x128xf32, #tpu.memory_space<vmem>>, %arg4: memref<1x128xf32, #tpu.memory_space<vmem>>) attributes {dimension_semantics = [#tpu.dimension_semantics<parallel>], iteration_bounds = array<i64: 1>, scalar_prefetch = 0 : i64, scratch_operands = 0 : i64, tpu.core_type = #tpu.core_type<tc>, window_params = [{transform_indices = @transform_0, window_bounds = array<i64: 10>}, {transform_indices = @transform_1, window_bounds = array<i64: 1>}, {transform_indices = @transform_2, window_bounds = array<i64: 10, 128>}, {transform_indices = @transform_3, window_bounds = array<i64: 1, 128>}]} {
    %c0 = arith.constant 0 : index
    %c0_0 = arith.constant 0 : index
    %0 = vector.load %arg3[%c0, %c0_0] : memref<10x128xf32, #tpu.memory_space<vmem>>, vector<1x128xf32>
    %c0_1 = arith.constant 0 : index
    %1 = memref.load %arg1[%c0_1] : memref<10xf32, #tpu.memory_space<smem>>
    %2 = vector.broadcast %1 : f32 to vector<1x128xf32>
    %3 = arith.mulf %0, %2 : vector<1x128xf32>
    %c1 = arith.constant 1 : index
    %c0_2 = arith.constant 0 : index
    %4 = vector.load %arg3[%c1, %c0_2] : memref<10x128xf32, #tpu.memory_space<vmem>>, vector<1x128xf32>
    %c1_3 = arith.constant 1 : index
    %5 = memref.load %arg1[%c1_3] : memref<10xf32, #tpu.memory_space<smem>>
    %6 = vector.broadcast %5 : f32 to vector<1x128xf32>
    %7 = arith.mulf %4, %6 : vector<1x128xf32>
    %8 = arith.addf %3, %7 : vector<1x128xf32>
    %c2 = arith.constant 2 : index
    %c0_4 = arith.constant 0 : index
    %9 = vector.load %arg3[%c2, %c0_4] : memref<10x128xf32, #tpu.memory_space<vmem>>, vector<1x128xf32>
    %c2_5 = arith.constant 2 : index
    %10 = memref.load %arg1[%c2_5] : memref<10xf32, #tpu.memory_space<smem>>
    %11 = vector.broadcast %10 : f32 to vector<1x128xf32>
    %12 = arith.mulf %9, %11 : vector<1x128xf32>
    %13 = arith.addf %8, %12 : vector<1x128xf32>
    %c3 = arith.constant 3 : index
    %c0_6 = arith.constant 0 : index
    %14 = vector.load %arg3[%c3, %c0_6] : memref<10x128xf32, #tpu.memory_space<vmem>>, vector<1x128xf32>
    %c3_7 = arith.constant 3 : index
    %15 = memref.load %arg1[%c3_7] : memref<10xf32, #tpu.memory_space<smem>>
    %16 = vector.broadcast %15 : f32 to vector<1x128xf32>
    %17 = arith.mulf %14, %16 : vector<1x128xf32>
    %18 = arith.addf %13, %17 : vector<1x128xf32>
    %c4 = arith.constant 4 : index
    %c0_8 = arith.constant 0 : index
    %19 = vector.load %arg3[%c4, %c0_8] : memref<10x128xf32, #tpu.memory_space<vmem>>, vector<1x128xf32>
    %c4_9 = arith.constant 4 : index
    %20 = memref.load %arg1[%c4_9] : memref<10xf32, #tpu.memory_space<smem>>
    %21 = vector.broadcast %20 : f32 to vector<1x128xf32>
    %22 = arith.mulf %19, %21 : vector<1x128xf32>
    %23 = arith.addf %18, %22 : vector<1x128xf32>
    %c5 = arith.constant 5 : index
    %c0_10 = arith.constant 0 : index
    %24 = vector.load %arg3[%c5, %c0_10] : memref<10x128xf32, #tpu.memory_space<vmem>>, vector<1x128xf32>
    %c5_11 = arith.constant 5 : index
    %25 = memref.load %arg1[%c5_11] : memref<10xf32, #tpu.memory_space<smem>>
    %26 = vector.broadcast %25 : f32 to vector<1x128xf32>
    %27 = arith.mulf %24, %26 : vector<1x128xf32>
    %28 = arith.addf %23, %27 : vector<1x128xf32>
    %c6 = arith.constant 6 : index
    %c0_12 = arith.constant 0 : index
    %29 = vector.load %arg3[%c6, %c0_12] : memref<10x128xf32, #tpu.memory_space<vmem>>, vector<1x128xf32>
    %c6_13 = arith.constant 6 : index
    %30 = memref.load %arg1[%c6_13] : memref<10xf32, #tpu.memory_space<smem>>
    %31 = vector.broadcast %30 : f32 to vector<1x128xf32>
    %32 = arith.mulf %29, %31 : vector<1x128xf32>
    %33 = arith.addf %28, %32 : vector<1x128xf32>
    %c7 = arith.constant 7 : index
    %c0_14 = arith.constant 0 : index
    %34 = vector.load %arg3[%c7, %c0_14] : memref<10x128xf32, #tpu.memory_space<vmem>>, vector<1x128xf32>
    %c7_15 = arith.constant 7 : index
    %35 = memref.load %arg1[%c7_15] : memref<10xf32, #tpu.memory_space<smem>>
    %36 = vector.broadcast %35 : f32 to vector<1x128xf32>
    %37 = arith.mulf %34, %36 : vector<1x128xf32>
    %38 = arith.addf %33, %37 : vector<1x128xf32>
    %c8 = arith.constant 8 : index
    %c0_16 = arith.constant 0 : index
    %39 = vector.load %arg3[%c8, %c0_16] : memref<10x128xf32, #tpu.memory_space<vmem>>, vector<1x128xf32>
    %c8_17 = arith.constant 8 : index
    %40 = memref.load %arg1[%c8_17] : memref<10xf32, #tpu.memory_space<smem>>
    %41 = vector.broadcast %40 : f32 to vector<1x128xf32>
    %42 = arith.mulf %39, %41 : vector<1x128xf32>
    %43 = arith.addf %38, %42 : vector<1x128xf32>
    %c9 = arith.constant 9 : index
    %c0_18 = arith.constant 0 : index
    %44 = vector.load %arg3[%c9, %c0_18] : memref<10x128xf32, #tpu.memory_space<vmem>>, vector<1x128xf32>
    %c9_19 = arith.constant 9 : index
    %45 = memref.load %arg1[%c9_19] : memref<10xf32, #tpu.memory_space<smem>>
    %46 = vector.broadcast %45 : f32 to vector<1x128xf32>
    %47 = arith.mulf %44, %46 : vector<1x128xf32>
    %48 = arith.addf %43, %47 : vector<1x128xf32>
    %c0_20 = arith.constant 0 : index
    %49 = memref.load %arg2[%c0_20] : memref<1xf32, #tpu.memory_space<smem>>
    %50 = vector.broadcast %49 : f32 to vector<1x128xf32>
    %51 = arith.addf %48, %50 : vector<1x128xf32>
    %c0_21 = arith.constant 0 : index
    %c0_22 = arith.constant 0 : index
    %52 = vector.load %arg4[%c0_21, %c0_22] : memref<1x128xf32, #tpu.memory_space<vmem>>, vector<1x128xf32>
    tpu.vector_store %arg4[%c0_21, %c0_22], %51 {strides = array<i32>} : memref<1x128xf32, #tpu.memory_space<vmem>>, vector<1x128xf32>,
    return
  }
  func.func @transform_0(%arg0: i32) -> i32 {
    %c0_i32 = arith.constant 0 : i32
    %c0_i32_0 = arith.constant 0 : i32
    return %c0_i32 : i32
  }
  func.func @transform_1(%arg0: i32) -> i32 {
    %c0_i32 = arith.constant 0 : i32
    %c0_i32_0 = arith.constant 0 : i32
    return %c0_i32 : i32
  }
  func.func @transform_2(%arg0: i32) -> (i32, i32) {
    %c0_i32 = arith.constant 0 : i32
    %c0_i32_0 = arith.constant 0 : i32
    return %c0_i32, %arg0 : i32, i32
  }
  func.func @transform_3(%arg0: i32) -> (i32, i32) {
    %c0_i32 = arith.constant 0 : i32
    %c0_i32_0 = arith.constant 0 : i32
    return %c0_i32, %arg0 : i32, i32
  }
}

</mosaic_0001>

<llo_original>
// kernel: simple_binary_classifier.1
$region0: #{simple_binary_classifier.1}
  #allocation0 [shape = 'u32[]', space=smem, size = 0x4, offset = 0x4, fixed_abs, tag = 'smem constant byte address 0x4 - core index']
  #allocation1 [shape = 'u32[144,128]{1,0:T(1,128)}', space=vmem, size = 0x12000, scoped, tag = 'internal scratch']
  #allocation2 [shape = 'f32[1]{0:T(128)S(6)}', space=smem, size = 0x200, scoped, tag = 'scoped memory for simple_binary_classifier.1']
  %s0 = inlined_call_operand.vmem [shape: f32[10], index: 0, kind: input, shape index: {}]
  %s1 = inlined_call_operand.<no memory space> [shape: f32[1], index: 1, kind: input, shape index: {}]
  %s2 = inlined_call_operand.vmem [shape: f32[10,128], index: 2, kind: input, shape index: {}]
  %s3 = inlined_call_operand.vmem [shape: f32[1,128], index: 3, kind: output, shape index: {}]
  %s4 = sld [smem:[#allocation0]]
  $region26: #{simple_binary_classifier.1} parent=0
    _
  %s6 = ssub.s32 1, %s4
  %s7 = scalar_select 0, %s6, %s4
  %8 = sst [smem:[#allocation2]] %s1
  $region1: #{simple_binary_classifier.1} parent=0
    #allocation3 [shape = 'u8[512]{0}', space=smem, size = 0x200, scoped, tag = 'input window, operand 0, single buffered']
    #allocation4 [shape = 's32[1]{0}', space=sflag, size = 0x4, scoped, tag = 'scoped memory for simple_binary_classifier.1']
    %9 = vsyncpa [#allocation4], 0
    // Predicated region
    $region2: #{simple_binary_classifier.1} parent=1 // pred_check
      _
    $region3: #{simple_binary_classifier.1} parent=1 // pred_check_branch
      %11 = sbr.rel (0) target = $region5
    $region4: #{simple_binary_classifier.1} parent=1 // pred_region
      %s13 = ssub.s32 16, 16
      %14 = vsyncadd [#allocation4], %s13
      %s16 = sshll.u32 %s0, 4
      %s17 = int_to_ptr.vmem [resolvable:$true] %s16
      %19 = dma.vmem_to_smem %s17, 16, [#allocation3], [#allocation4]
    $region5: #{simple_binary_classifier.1} parent=1 // pred_fallthru
      _
    // Predicated region
    $region6: #{simple_binary_classifier.1} parent=1 // pred_check
      _
    $region7: #{simple_binary_classifier.1} parent=1 // pred_check_branch
      %21 = sbr.rel (0) target = $region9
    $region8: #{simple_binary_classifier.1} parent=1 // pred_region
      _
    $region9: #{simple_binary_classifier.1} parent=1 // pred_fallthru
      _
    // Predicated region
    $region10: #{simple_binary_classifier.1} parent=1 // pred_check
      _
    $region11: #{simple_binary_classifier.1} parent=1 // pred_check_branch
      %23 = sbr.rel (0) target = $region13
    $region12: #{simple_binary_classifier.1} parent=1 // pred_region
      _
    $region13: #{simple_binary_classifier.1} parent=1 // pred_fallthru
      _
    // Predicated region
    $region14: #{simple_binary_classifier.1} parent=1 // pred_check
      _
    $region15: #{simple_binary_classifier.1} parent=1 // pred_check_branch
      %25 = sbr.rel (0) target = $region17
    $region16: #{simple_binary_classifier.1} parent=1 // pred_region
      %26 = dma.done [#allocation4], 16
    $region17: #{simple_binary_classifier.1} parent=1 // pred_fallthru
      _
    %27 = sfence
    %v28 = vld [vmem:[%s2] sm:$0x1]
    %s29 = sld [smem:[#allocation3]]
    %v30 = vstv %s29
    %v31 = vmul.f32 %v28, %v30
    %v32 = vld [vmem:[%s2 + $0x1] sm:$0x1]
    %s33 = sld [smem:[#allocation3 + $0x1]]
    %v34 = vstv %s33
    %v35 = vmul.f32 %v32, %v34
    %v36 = vadd.f32 %v31, %v35
    %v37 = vld [vmem:[%s2 + $0x2] sm:$0x1]
    %s38 = sld [smem:[#allocation3 + $0x2]]
    %v39 = vstv %s38
    %v40 = vmul.f32 %v37, %v39
    %v41 = vadd.f32 %v36, %v40
    %v42 = vld [vmem:[%s2 + $0x3] sm:$0x1]
    %s43 = sld [smem:[#allocation3 + $0x3]]
    %v44 = vstv %s43
    %v45 = vmul.f32 %v42, %v44
    %v46 = vadd.f32 %v41, %v45
    %v47 = vld [vmem:[%s2 + $0x4] sm:$0x1]
    %s48 = sld [smem:[#allocation3 + $0x4]]
    %v49 = vstv %s48
    %v50 = vmul.f32 %v47, %v49
    %v51 = vadd.f32 %v46, %v50
    %v52 = vld [vmem:[%s2 + $0x5] sm:$0x1]
    %s53 = sld [smem:[#allocation3 + $0x5]]
    %v54 = vstv %s53
    %v55 = vmul.f32 %v52, %v54
    %v56 = vadd.f32 %v51, %v55
    %v57 = vld [vmem:[%s2 + $0x6] sm:$0x1]
    %s58 = sld [smem:[#allocation3 + $0x6]]
    %v59 = vstv %s58
    %v60 = vmul.f32 %v57, %v59
    %v61 = vadd.f32 %v56, %v60
    %v62 = vld [vmem:[%s2 + $0x7] sm:$0x1]
    %s63 = sld [smem:[#allocation3 + $0x7]]
    %v64 = vstv %s63
    %v65 = vmul.f32 %v62, %v64
    %v66 = vadd.f32 %v61, %v65
    %v67 = vld [vmem:[%s2 + $0x8] sm:$0x1]
    %s68 = sld [smem:[#allocation3 + $0x8]]
    %v69 = vstv %s68
    %v70 = vmul.f32 %v67, %v69
    %v71 = vadd.f32 %v66, %v70
    %v72 = vld [vmem:[%s2 + $0x9] sm:$0x1]
    %s73 = sld [smem:[#allocation3 + $0x9]]
    %v74 = vstv %s73
    %v75 = vmul.f32 %v72, %v74
    %v76 = vadd.f32 %v71, %v75
    %s77 = sld [smem:[#allocation2]]
    %v78 = vstv %s77
    %v79 = vadd.f32 %v76, %v78
    %80 = vst [vmem:[%s3] sm:$0x1] %v79
    // Predicated region
    $region18: #{simple_binary_classifier.1} parent=1 // pred_check
      _
    $region19: #{simple_binary_classifier.1} parent=1 // pred_check_branch
      %82 = sbr.rel (0) target = $region21
    $region20: #{simple_binary_classifier.1} parent=1 // pred_region
      _
    $region21: #{simple_binary_classifier.1} parent=1 // pred_fallthru
      _
    // Predicated region
    $region22: #{simple_binary_classifier.1} parent=1 // pred_check
      _
    $region23: #{simple_binary_classifier.1} parent=1 // pred_check_branch
      %84 = sbr.rel (0) target = $region25
    $region24: #{simple_binary_classifier.1} parent=1 // pred_region
      _
    $region25: #{simple_binary_classifier.1} parent=1 // pred_fallthru
      _
    %85 = vsyncpa [#allocation4], 1

</llo_original>
